<compile_context>
chip_gen: v7x
topology: tpu7x:2x2x1
jax: 0.10.0
libtpu: 0.0.40
codegen_flags: <defaults>
</compile_context>

<pallas_src>
import functools

import jax
import jax.numpy as jnp
from jax.experimental import pallas as pl
from jax.experimental.pallas import tpu as pltpu


# ---------------------------------------------------------------------------
# Kernels (embeddings tile: (TB, TS, E), mask tile: (TB, TS, 1))
# ---------------------------------------------------------------------------
def _max_pool_kernel(emb_ref, mask_ref, w_out_ref, b_out_ref, out_ref, acc_ref):
    s = pl.program_id(1)

    @pl.when(s == 0)
    def _():
        acc_ref[...] = jnp.full(acc_ref.shape, -jnp.inf, dtype=acc_ref.dtype)

    emb = emb_ref[...].astype(jnp.float32)                       # (TB, TS, E)
    valid = mask_ref[...] != 0                                   # (TB, TS, 1)
    masked = jnp.where(valid, emb, jnp.float32(-1e10))           # masked_fill(mask==0, -1e10)
    # running max over the S chunk: sublane reduce, accumulated across the S grid axis
    acc_ref[...] = jnp.maximum(acc_ref[...], jnp.max(masked, axis=1))

    @pl.when(s == pl.num_programs(1) - 1)
    def _():
        pooled = acc_ref[...]                                    # (TB, E)
        pred = jnp.dot(pooled, w_out_ref[...].astype(jnp.float32),
                       preferred_element_type=jnp.float32)
        pred = pred + b_out_ref[...].astype(jnp.float32)         # (TB, O_pad) lane-dense
        out_ref[...] = pred.astype(out_ref.dtype)


def _weighted_mean_kernel(emb_ref, mask_ref, w_pool_ref, w_out_ref, b_out_ref,
                          out_ref, acc_ref, *, inv_seq_len):
    s = pl.program_id(1)

    @pl.when(s == 0)
    def _():
        acc_ref[...] = jnp.zeros_like(acc_ref)

    emb = emb_ref[...].astype(jnp.float32)                       # (TB, TS, E)
    tb, ts, e = emb.shape
    valid = (mask_ref[...] != 0).astype(jnp.float32)             # (TB, TS, 1)

    # attention logits: contract E on the lane axis with a plain 2-D MXU matmul
    logits = jnp.dot(emb.reshape(tb * ts, e),
                     w_pool_ref[...].astype(jnp.float32),
                     preferred_element_type=jnp.float32)         # (TB*TS, 1)
    w = jax.nn.sigmoid(logits).reshape(tb, ts, 1) * valid        # masked positions -> 0

    # fused per-S-chunk weighted reduction straight into the scratch accumulator
    acc_ref[...] += jnp.sum(emb * w, axis=1)                     # (TB, E) sublane reduce

    @pl.when(s == pl.num_programs(1) - 1)
    def _():
        # avg_pool1d(kernel_size=seq_len) divides by the full seq_len (masked incl.)
        pooled = acc_ref[...] * jnp.float32(inv_seq_len)         # (TB, E)
        pred = jnp.dot(pooled, w_out_ref[...].astype(jnp.float32),
                       preferred_element_type=jnp.float32)
        pred = pred + b_out_ref[...].astype(jnp.float32)
        out_ref[...] = pred.astype(out_ref.dtype)


# ---------------------------------------------------------------------------
# Wrapper
# ---------------------------------------------------------------------------
def _choose_tile(n, cap):
    """Largest multiple-of-8 divisor of n that is <= cap; falls back to n (full extent)."""
    if n % 8 != 0:
        return n
    cap = max(8, cap - cap % 8)
    t = min(n, cap)
    t -= t % 8
    while n % t:
        t -= 8
    return t


def embedding_predictor(embeddings, mask, params, pool_mode):
    """embeddings: (B, E, S) (PyTorch NCL layout), mask: (B, S). Returns (B, O) f32."""
    assert pool_mode in ("max", "weighted_mean")
    B, E, S = embeddings.shape
    O = params["w_out"].shape[0]

    # ---- wrapper-side layout plumbing (done once by XLA, outside the kernel) ------
    # TODO(synk): in production, produce embeddings directly in (B, S, E) to skip this transpose.
    emb_bse = jnp.transpose(embeddings, (0, 2, 1))               # (B, S, E): E on lanes
    mask3 = mask.reshape(B, S, 1)                                # tiles along S like emb

    o_pad = ((O + 127) // 128) * 128                             # lane-dense output stores
    w_out_t = jnp.zeros((E, o_pad), jnp.float32).at[:, :O].set(
        params["w_out"].T.astype(jnp.float32))                   # pre-transposed, no in-kernel .T
    b_out_p = jnp.zeros((1, o_pad), jnp.float32).at[:, :O].set(
        params["b_out"].reshape(1, O).astype(jnp.float32))

    # ---- tiling: ~4 MiB embedding block, 2x double-buffered -> well under v7x VMEM ----
    itemsize = jnp.dtype(emb_bse.dtype).itemsize
    TB = _choose_tile(B, 64)
    TS = _choose_tile(S, max(8, (4 << 20) // max(1, TB * E * itemsize)))
    grid = (B // TB, S // TS)

    emb_spec = pl.BlockSpec((TB, TS, E), lambda b, s: (b, s, 0))
    mask_spec = pl.BlockSpec((TB, TS, 1), lambda b, s: (b, s, 0))
    wout_spec = pl.BlockSpec((E, o_pad), lambda b, s: (0, 0))
    bout_spec = pl.BlockSpec((1, o_pad), lambda b, s: (0, 0))
    out_spec = pl.BlockSpec((TB, o_pad), lambda b, s: (b, 0))    # resident across S axis

    if pool_mode == "max":
        kernel = _max_pool_kernel
        args = (emb_bse, mask3, w_out_t, b_out_p)
        in_specs = [emb_spec, mask_spec, wout_spec, bout_spec]
    else:
        w_pool_col = params["w_pool"].reshape(E, 1).astype(jnp.float32)
        wpool_spec = pl.BlockSpec((E, 1), lambda b, s: (0, 0))
        kernel = functools.partial(_weighted_mean_kernel, inv_seq_len=1.0 / S)
        args = (emb_bse, mask3, w_pool_col, w_out_t, b_out_p)
        in_specs = [emb_spec, mask_spec, wpool_spec, wout_spec, bout_spec]

    out = pl.pallas_call(
        kernel,
        out_shape=jax.ShapeDtypeStruct((B, o_pad), jnp.float32),
        grid_spec=pltpu.PrefetchScalarGridSpec(
            num_scalar_prefetch=0,
            grid=grid,
            in_specs=in_specs,
            out_specs=out_spec,
            scratch_shapes=[pltpu.VMEM((TB, E), jnp.float32)],   # running max / weighted sum
        ),
        compiler_params=pltpu.CompilerParams(
            dimension_semantics=("parallel", "arbitrary")),      # B across TCs, S = reduction
    )(*args)

    return out[:, :O]


# ---------------------------------------------------------------------------
# Pure-JAX reference (mirrors the PyTorch forward exactly, (B, E, S) layout)
# ---------------------------------------------------------------------------
def reference(embeddings, mask, params, pool_mode):
    emb = embeddings.astype(jnp.float32)
    valid = (mask != 0)[:, None, :]
    if pool_mode == "max":
        masked = jnp.where(valid, emb, -1e10)
        pooled = jnp.max(masked, axis=-1)
    else:
        logits = jnp.einsum("bes,e->bs", emb, params["w_pool"][0])
        w = jax.nn.sigmoid(logits)
        weighted = emb * w[:, None, :]
        weighted = jnp.where(valid, weighted, 0.0)
        pooled = jnp.mean(weighted, axis=-1)
    return pooled @ params["w_out"].T + params["b_out"]


# ---------------------------------------------------------------------------
if __name__ == "__main__":
    B, E, S, O = 2, 32, 8, 4

    key = jax.random.PRNGKey(0)
    k_emb, k_wp, k_wo, k_bo = jax.random.split(key, 4)

    embeddings = jax.random.normal(k_emb, (B, E, S), dtype=jnp.float32)
    lengths = jnp.array([[5], [8]], dtype=jnp.int32)
    mask = (jnp.arange(S)[None, :] < lengths).astype(jnp.float32)       # (B, S)

    params = {
        "w_pool": jax.random.normal(k_wp, (1, E), dtype=jnp.float32) * 0.1,  # Linear(E, 1, bias=False)
        "w_out": jax.random.normal(k_wo, (O, E), dtype=jnp.float32) * 0.1,   # Linear(E, O).weight
        "b_out": jax.random.normal(k_bo, (O,), dtype=jnp.float32) * 0.1,     # Linear(E, O).bias
    }

    for mode in ("max", "weighted_mean"):
        out = embedding_predictor(embeddings, mask, params, mode)
        out = jax.block_until_ready(out)
        ref = reference(embeddings, mask, params, mode)
        assert out.shape == (B, O)
        assert jnp.allclose(out, ref, atol=1e-3, rtol=1e-3), f"mismatch in mode={mode}"

    print("KERNEL_OK")
</pallas_src>

<mosaic_0001>
module attributes {stable_mosaic.version = 11 : i64} {
  func.func @_max_pool_kernel(%arg0: i32, %arg1: i32, %arg2: memref<2x8x32xf32, #tpu.memory_space<vmem>>, %arg3: memref<2x8x1xf32, #tpu.memory_space<vmem>>, %arg4: memref<32x128xf32, #tpu.memory_space<vmem>>, %arg5: memref<1x128xf32, #tpu.memory_space<vmem>>, %arg6: memref<2x128xf32, #tpu.memory_space<vmem>>, %arg7: memref<2x32xf32, #tpu.memory_space<vmem>>) attributes {dimension_semantics = [#tpu.dimension_semantics<parallel>, #tpu.dimension_semantics<arbitrary>], iteration_bounds = array<i64: 1, 1>, scalar_prefetch = 0 : i64, scratch_operands = 1 : i64, tpu.core_type = #tpu.core_type<tc>, window_params = [{transform_indices = @transform_0, window_bounds = array<i64: 2, 8, 32>}, {transform_indices = @transform_1, window_bounds = array<i64: 2, 8, 1>}, {pipeline_mode = #tpu.pipeline_mode<synchronous>, transform_indices = @transform_2, window_bounds = array<i64: 32, 128>}, {pipeline_mode = #tpu.pipeline_mode<synchronous>, transform_indices = @transform_3, window_bounds = array<i64: 1, 128>}, {transform_indices = @transform_4, window_bounds = array<i64: 2, 128>}]} {
    %c0_i32 = arith.constant 0 : i32
    %0 = arith.cmpi eq, %arg1, %c0_i32 : i32
    %1 = arith.extui %0 : i1 to i32
    %c0_i32_0 = arith.constant 0 : i32
    %2 = arith.cmpi ne, %1, %c0_i32_0 : i32
    scf.if %2 {
      %cst_14 = arith.constant 0xFF800000 : f32
      %18 = vector.broadcast %cst_14 : f32 to vector<2x32xf32>
      %c0_15 = arith.constant 0 : index
      %c0_16 = arith.constant 0 : index
      %19 = vector.load %arg7[%c0_15, %c0_16] : memref<2x32xf32, #tpu.memory_space<vmem>>, vector<2x32xf32>
      tpu.vector_store %arg7[%c0_15, %c0_16], %18 {strides = array<i32>} : memref<2x32xf32, #tpu.memory_space<vmem>>, vector<2x32xf32>,
    } else {
    }
    %c0 = arith.constant 0 : index
    %c0_1 = arith.constant 0 : index
    %c0_2 = arith.constant 0 : index
    %3 = vector.load %arg2[%c0, %c0_1, %c0_2] : memref<2x8x32xf32, #tpu.memory_space<vmem>>, vector<2x8x32xf32>
    %c0_3 = arith.constant 0 : index
    %c0_4 = arith.constant 0 : index
    %c0_5 = arith.constant 0 : index
    %4 = vector.load %arg3[%c0_3, %c0_4, %c0_5] : memref<2x8x1xf32, #tpu.memory_space<vmem>>, vector<2x8x1xf32>
    %cst = arith.constant 0.000000e+00 : f32
    %5 = vector.broadcast %cst : f32 to vector<2x8x1xf32>
    %6 = arith.cmpf one, %4, %5 : vector<2x8x1xf32>
    %cst_6 = arith.constant -1.000000e+10 : f32
    %7 = vector.shape_cast %6 : vector<2x8x1xi1> to vector<2x8x1xi1>
    %8 = vector.broadcast %7 : vector<2x8x1xi1> to vector<2x8x32xi1>
    %9 = vector.broadcast %cst_6 : f32 to vector<2x8x32xf32>
    %10 = arith.select %8, %3, %9 : vector<2x8x32xi1>, vector<2x8x32xf32>
    %c0_7 = arith.constant 0 : index
    %c0_8 = arith.constant 0 : index
    %11 = vector.load %arg7[%c0_7, %c0_8] : memref<2x32xf32, #tpu.memory_space<vmem>>, vector<2x32xf32>
    %cst_9 = arith.constant dense<0xFF800000> : vector<2x32xf32>
    %12 = vector.multi_reduction <maximumf>, %10, %cst_9 [1] : vector<2x8x32xf32> to vector<2x32xf32>
    %13 = arith.maximumf %11, %12 : vector<2x32xf32>
    %c0_10 = arith.constant 0 : index
    %c0_11 = arith.constant 0 : index
    %14 = vector.load %arg7[%c0_10, %c0_11] : memref<2x32xf32, #tpu.memory_space<vmem>>, vector<2x32xf32>
    tpu.vector_store %arg7[%c0_10, %c0_11], %13 {strides = array<i32>} : memref<2x32xf32, #tpu.memory_space<vmem>>, vector<2x32xf32>,
    %c0_i32_12 = arith.constant 0 : i32
    %15 = arith.cmpi eq, %arg1, %c0_i32_12 : i32
    %16 = arith.extui %15 : i1 to i32
    %c0_i32_13 = arith.constant 0 : i32
    %17 = arith.cmpi ne, %16, %c0_i32_13 : i32
    scf.if %17 {
      %c0_14 = arith.constant 0 : index
      %c0_15 = arith.constant 0 : index
      %18 = vector.load %arg7[%c0_14, %c0_15] : memref<2x32xf32, #tpu.memory_space<vmem>>, vector<2x32xf32>
      %c0_16 = arith.constant 0 : index
      %c0_17 = arith.constant 0 : index
      %19 = vector.load %arg4[%c0_16, %c0_17] : memref<32x128xf32, #tpu.memory_space<vmem>>, vector<32x128xf32>
      %cst_18 = arith.constant dense<0.000000e+00> : vector<2x128xf32>
      %20 = tpu.matmul %18, %19, %cst_18 {dimension_numbers = #tpu.dot_dimension_numbers<[1], [0], [0], [1], [0, 0, 1, 1], [], []>} : vector<2x32xf32>, vector<32x128xf32>, vector<2x128xf32> -> vector<2x128xf32>
      %c0_19 = arith.constant 0 : index
      %c0_20 = arith.constant 0 : index
      %21 = vector.load %arg5[%c0_19, %c0_20] : memref<1x128xf32, #tpu.memory_space<vmem>>, vector<1x128xf32>
      %22 = vector.broadcast %21 : vector<1x128xf32> to vector<2x128xf32>
      %23 = arith.addf %20, %22 : vector<2x128xf32>
      %c0_21 = arith.constant 0 : index
      %c0_22 = arith.constant 0 : index
      %24 = vector.load %arg6[%c0_21, %c0_22] : memref<2x128xf32, #tpu.memory_space<vmem>>, vector<2x128xf32>
      tpu.vector_store %arg6[%c0_21, %c0_22], %23 {strides = array<i32>} : memref<2x128xf32, #tpu.memory_space<vmem>>, vector<2x128xf32>,
    } else {
    }
    return
  }
  func.func @transform_0(%arg0: i32, %arg1: i32) -> (i32, i32, i32) {
    %c0_i32 = arith.constant 0 : i32
    %c0_i32_0 = arith.constant 0 : i32
    return %arg0, %arg1, %c0_i32 : i32, i32, i32
  }
  func.func @transform_1(%arg0: i32, %arg1: i32) -> (i32, i32, i32) {
    %c0_i32 = arith.constant 0 : i32
    %c0_i32_0 = arith.constant 0 : i32
    return %arg0, %arg1, %c0_i32 : i32, i32, i32
  }
  func.func @transform_2(%arg0: i32, %arg1: i32) -> (i32, i32) {
    %c0_i32 = arith.constant 0 : i32
    %c0_i32_0 = arith.constant 0 : i32
    %c0_i32_1 = arith.constant 0 : i32
    return %c0_i32, %c0_i32_0 : i32, i32
  }
  func.func @transform_3(%arg0: i32, %arg1: i32) -> (i32, i32) {
    %c0_i32 = arith.constant 0 : i32
    %c0_i32_0 = arith.constant 0 : i32
    %c0_i32_1 = arith.constant 0 : i32
    return %c0_i32, %c0_i32_0 : i32, i32
  }
  func.func @transform_4(%arg0: i32, %arg1: i32) -> (i32, i32) {
    %c0_i32 = arith.constant 0 : i32
    %c0_i32_0 = arith.constant 0 : i32
    return %arg0, %c0_i32 : i32, i32
  }
}

</mosaic_0001>

<llo_original>
// kernel: tpu_custom_call.1
$region0: #{tpu_custom_call.1}
  #allocation0 [shape = 'u32[]', space=smem, size = 0x4, offset = 0x4, fixed_abs, tag = 'smem constant byte address 0x4 - core index']
  #allocation1 [shape = 'u32[144,128]{1,0:T(1,128)}', space=vmem, size = 0x12000, scoped, tag = 'internal scratch']
  #allocation2 [shape = 'f32[2,32]{1,0:T(2,128)}', space=vmem, size = 0x400, scoped, tag = 'scratch operand']
  %s0 = inlined_call_operand.vmem [shape: f32[2,8,32], index: 0, kind: input, shape index: {}]
  %s1 = inlined_call_operand.vmem [shape: f32[2,8,1], index: 1, kind: input, shape index: {}]
  %s2 = inlined_call_operand.hbm [shape: f32[32,128], index: 2, kind: input, shape index: {}]
  %s3 = inlined_call_operand.vmem [shape: f32[1,128], index: 3, kind: input, shape index: {}]
  %s4 = inlined_call_operand.hbm [shape: f32[2,128], index: 4, kind: output, shape index: {}]
  %s5 = sld [smem:[#allocation0]]
  $region38: #{tpu_custom_call.1} parent=0
    _
  %s7 = ssub.s32 1, %s5
  %s8 = scalar_select 0, %s7, %s5
  $region1: #{tpu_custom_call.1} parent=0
    #allocation3 [shape = 'u8[16384]{0}', space=vmem, size = 0x4000, scoped, tag = 'input window, operand 2, single buffered']
    #allocation4 [shape = 's32[1]{0}', space=sflag, size = 0x4, scoped, tag = 'scoped memory for tpu_custom_call.1']
    #allocation5 [shape = 's32[1]{0}', space=sflag, size = 0x4, scoped, tag = 'scoped memory for tpu_custom_call.1']
    #allocation6 [shape = 'u8[1024]{0}', space=vmem, size = 0x400, scoped, tag = 'output window, operand 0, single buffered']
    %9 = vsyncpa [#allocation4], 0
    %10 = vsyncpa [#allocation5], 0
    // Predicated region
    $region2: #{tpu_custom_call.1} parent=1 // pred_check
      _
    $region3: #{tpu_custom_call.1} parent=1 // pred_check_branch
      %12 = sbr.rel (0) target = $region5
    $region4: #{tpu_custom_call.1} parent=1 // pred_region
      _
    $region5: #{tpu_custom_call.1} parent=1 // pred_fallthru
      _
    // Predicated region
    $region6: #{tpu_custom_call.1} parent=1 // pred_check
      _
    $region7: #{tpu_custom_call.1} parent=1 // pred_check_branch
      %14 = sbr.rel (0) target = $region9
    $region8: #{tpu_custom_call.1} parent=1 // pred_region
      _
    $region9: #{tpu_custom_call.1} parent=1 // pred_fallthru
      _
    // Predicated region
    $region10: #{tpu_custom_call.1} parent=1 // pred_check
      _
    $region11: #{tpu_custom_call.1} parent=1 // pred_check_branch
      %16 = sbr.rel (0) target = $region13
    $region12: #{tpu_custom_call.1} parent=1 // pred_region
      %s18 = ssub.s32 512, 512
      %19 = vsyncadd [#allocation4], %s18
      %s20 = sshll.u32 [#allocation3], 4
      %s21 = int_to_ptr.vmem [resolvable:$true] %s20
      %26 = dma.hbm_to_vmem [thread:$0]  %s2, 512, %s21, [#allocation4], 128, 128, 8
    $region13: #{tpu_custom_call.1} parent=1 // pred_fallthru
      _
    // Predicated region
    $region14: #{tpu_custom_call.1} parent=1 // pred_check
      _
    $region15: #{tpu_custom_call.1} parent=1 // pred_check_branch
      %28 = sbr.rel (0) target = $region17
    $region16: #{tpu_custom_call.1} parent=1 // pred_region
      _
    $region17: #{tpu_custom_call.1} parent=1 // pred_fallthru
      _
    // Predicated region
    $region18: #{tpu_custom_call.1} parent=1 // pred_check
      _
    $region19: #{tpu_custom_call.1} parent=1 // pred_check_branch
      %30 = sbr.rel (0) target = $region21
    $region20: #{tpu_custom_call.1} parent=1 // pred_region
      %31 = dma.done [#allocation4], 512
    $region21: #{tpu_custom_call.1} parent=1 // pred_fallthru
      _
    %p32 = scmp.eq.s32.totalorder 0, 0
    // Predicated region
    $region22: #{tpu_custom_call.1} parent=1 // pred_check
      %p33 = pneg %p32
    $region23: #{tpu_custom_call.1} parent=1 // pred_check_branch
      %35 = sbr.rel (%p33) target = $region25
    $region24: #{tpu_custom_call.1} parent=1 // pred_region
      %vm36 = vcmask 254976
      %37 = vst.msk [vmem:[#allocation2] sm:$0x3] %vm36, -inf
    $region25: #{tpu_custom_call.1} parent=1 // pred_fallthru
      _
    %v38 = vld [vmem:[%s0] sm:$0xff]
    %v39 = vld [vmem:[%s0 + $0x8] sm:$0xff]
    %v40 = vld [vmem:[%s1] sm:$0xff]
    %v41 = vld [vmem:[%s1 + $0x8] sm:$0xff]
    %vm42 = vcmp.ne.f32.partialorder %v40, 0.0
    %vm43 = vcmp.ne.f32.partialorder %v41, 0.0
    %v44 = vsel %vm42, 1, 0
    %v45 = vsel %vm43, 1, 0
    %46 = vset.pattern.permute.xlu0 0
    %47 = vperm.xlu0 %46, %v44
    %v48 = vpop.permute.xlu0 %47
    %49 = vset.pattern.permute.xlu0 0
    %50 = vperm.xlu0 %49, %v45
    %v51 = vpop.permute.xlu0 %50
    %vm52 = vcmp.eq.s32.totalorder %v48, 1
    %vm53 = vcmp.eq.s32.totalorder %v51, 1
    %v54 = vsel %vm52, %v38, -1e+10
    %v55 = vsel %vm53, %v39, -1e+10
    %v56 = vld [vmem:[#allocation2] sm:$0x3]
    %vm57 = vcmask 261120
    %v58 = vsel %vm57, %v54, -inf
    %v59 = vrot.slane %v58, 4
    %v60 = vmax.f32 %v58, %v59
    %v61 = vrot.slane %v60, 2
    %v62 = vmax.f32 %v60, %v61
    %v63 = vrot.slane %v62, 1
    %v64 = vmax.f32 %v62, %v63
    %v65 = vsel %vm57, %v55, -inf
    %v66 = vrot.slane %v65, 4
    %v67 = vmax.f32 %v65, %v66
    %v68 = vrot.slane %v67, 2
    %v69 = vmax.f32 %v67, %v68
    %v70 = vrot.slane %v69, 1
    %v71 = vmax.f32 %v69, %v70
    %vm74 = vcmask 1041409
    %v75 = vsel %vm74, %v71, %v64
    %v77 = vmax.f32 %v56, %v75
    %vm78 = vcmask 254976
    %79 = vst.msk [vmem:[#allocation2] sm:$0x3] %vm78, %v77
    // Predicated region
    $region26: #{tpu_custom_call.1} parent=1 // pred_check
      %p80 = pneg %p32
    $region27: #{tpu_custom_call.1} parent=1 // pred_check_branch
      %82 = sbr.rel (%p80) target = $region29
    $region28: #{tpu_custom_call.1} parent=1 // pred_region
      %v83 = vld [vmem:[#allocation2] sm:$0x3]
      %v84 = vld [vmem:[#allocation3] sm:$0xff]
      %v85 = vld [vmem:[#allocation3 + $0x8] sm:$0xff]
      %v86 = vld [vmem:[#allocation3 + $0x10] sm:$0xff]
      %v87 = vld [vmem:[#allocation3 + $0x18] sm:$0xff]
      %v88 = vld [vmem:[%s3] sm:$0x1]
      %v90 = vlaneseq
      %v91 = vshrl.u32 %v90, 7
      %v92 = vsub.s32 0, %v91
      %v93 = vrot.slane %v88, %v92
      %v96 = vsel %vm57, %v83, 0
      %98 = vmatprep.subr.mxu0 0.0
      %99 = vmatpush1.msra.mxu0 %v84
      %100 = vmatprep.subr.mxu0 0.0
      %101 = vmatpush1.msra.mxu0 %v85
      %102 = vmatprep.subr.mxu0 0.0
      %103 = vmatpush1.msra.mxu0 %v86
      %104 = vmatprep.subr.mxu0 0.0
      %105 = vmatpush1.msra.mxu0 %v87
      %106 = vmatprep.subr.mxu0 0.0
      %107 = vmatpush1.msra.mxu0 0.0
      %108 = vmatprep.subr.mxu0 0.0
      %109 = vmatpush1.msra.mxu0 0.0
      %110 = vmatprep.subr.mxu0 0.0
      %111 = vmatpush1.msra.mxu0 0.0
      %112 = vmatprep.subr.mxu0 0.0
      %113 = vmatpush1.msra.mxu0 0.0
      %114 = vmatprep.subr.mxu0 0.0
      %115 = vmatpush1.msra.mxu0 0.0
      %116 = vmatprep.subr.mxu0 0.0
      %117 = vmatpush1.msra.mxu0 0.0
      %118 = vmatprep.subr.mxu0 0.0
      %119 = vmatpush1.msra.mxu0 0.0
      %120 = vmatprep.subr.mxu0 0.0
      %121 = vmatpush1.msra.mxu0 0.0
      %122 = vmatprep.subr.mxu0 0.0
      %123 = vmatpush1.msra.mxu0 0.0
      %124 = vmatprep.subr.mxu0 0.0
      %125 = vmatpush1.msra.mxu0 0.0
      %126 = vmatprep.subr.mxu0 0.0
      %127 = vmatpush1.msra.mxu0 0.0
      %128 = vmatprep.subr.mxu0 0.0
      %129 = vmatpush1.msra.mxu0 0.0
      %130 = vmatprep.subr.mxu0 0.0
      %131 = vmatpush1.msra.mxu0 0.0
      %132 = vmatprep.subr.mxu0 0.0
      %133 = vmatpush1.msra.mxu0 0.0
      %134 = vmatprep.subr.mxu0 0.0
      %135 = vmatpush1.msra.mxu0 0.0
      %136 = vmatprep.subr.mxu0 0.0
      %137 = vmatpush1.msra.mxu0 0.0
      %138 = vmatprep.subr.mxu0 0.0
      %139 = vmatpush1.msra.mxu0 0.0
      %140 = vmatprep.subr.mxu0 0.0
      %141 = vmatpush1.msra.mxu0 0.0
      %142 = vmatprep.subr.mxu0 0.0
      %143 = vmatpush1.msra.mxu0 0.0
      %144 = vmatprep.subr.mxu0 0.0
      %145 = vmatpush1.msra.mxu0 0.0
      %146 = vmatprep.subr.mxu0 0.0
      %147 = vmatpush1.msra.mxu0 0.0
      %148 = vmatprep.subr.mxu0 0.0
      %149 = vmatpush1.msra.mxu0 0.0
      %150 = vmatprep.subr.mxu0 0.0
      %151 = vmatpush1.msra.mxu0 0.0
      %152 = vmatprep.subr.mxu0 0.0
      %153 = vmatpush1.msra.mxu0 0.0
      %154 = vmatprep.subr.mxu0 0.0
      %155 = vmatpush1.msra.mxu0 0.0
      %156 = vmatprep.subr.mxu0 0.0
      %157 = vmatpush1.msra.mxu0 0.0
      %158 = vmatprep.subr.mxu0 0.0
      %159 = vmatpush1.msra.mxu0 0.0
      %160 = vmatprep.subr.mxu0 0.0
      %161 = vmatpush1.msra.mxu0 0.0
      %162 = vmatprep.mubr.f32.mxu0 0.0
      %163 = vmatmul.mubr.f32.gmra.mrb[0].mxu0 %v96
      %v164 = vpop.f32.mrb[0].mxu0
      %v165 = vadd.f32 %v93, %v164
      %v166 = vpop.f32.mrb[0].mxu0
      %167 = vdwg.mxu0
      %168 = vst [vmem:[#allocation6] sm:$0x3] %v165
    $region29: #{tpu_custom_call.1} parent=1 // pred_fallthru
      _
    // Predicated region
    $region30: #{tpu_custom_call.1} parent=1 // pred_check
      _
    $region31: #{tpu_custom_call.1} parent=1 // pred_check_branch
      %170 = sbr.rel (0) target = $region33
    $region32: #{tpu_custom_call.1} parent=1 // pred_region
      %s172 = ssub.s32 32, 32
      %173 = vsyncadd [#allocation5], %s172
      %s175 = sshll.u32 [#allocation6], 4
      %s176 = int_to_ptr.vmem [resolvable:$true] %s175
      %178 = dma.vmem_to_hbm [thread:$0]  %s176, 32, %s4, [#allocation5]
    $region33: #{tpu_custom_call.1} parent=1 // pred_fallthru
      _
    // Predicated region
    $region34: #{tpu_custom_call.1} parent=1 // pred_check
      _
    $region35: #{tpu_custom_call.1} parent=1 // pred_check_branch
      %180 = sbr.rel (0) target = $region37
    $region36: #{tpu_custom_call.1} parent=1 // pred_region
      %181 = dma.done [#allocation5], 32
    $region37: #{tpu_custom_call.1} parent=1 // pred_fallthru
      _
    %182 = vsyncpa [#allocation4], 1
    %183 = vsyncpa [#allocation5], 1

</llo_original>
